<compile_context>
chip_gen: v7x
topology: tpu7x:2x2x1
jax: 0.10.0
libtpu: 0.0.40
codegen_flags: <defaults>
</compile_context>

<pallas_src>
import functools
import math

import jax
import jax.numpy as jnp
from jax import lax
from jax.experimental import pallas as pl
from jax.experimental.pallas import tpu as pltpu


# ----------------------------------------------------------------------------
# helpers
# ----------------------------------------------------------------------------
def _round_up(x, m):
    return ((x + m - 1) // m) * m


def _pick_tile(dim, preferred, quantum):
    """Largest tile <= preferred that divides `dim` and is a multiple of
    `quantum`; otherwise fall back to the full dimension (always legal: a block
    equal to the full array extent satisfies the (8, 128) rule)."""
    t = min(preferred, dim)
    t = (t // quantum) * quantum
    while t >= quantum:
        if dim % t == 0:
            return t
        t -= quantum
    return dim


# ----------------------------------------------------------------------------
# Kernel 1: tiled dense linear layer  y = x @ Wt + b   (in_proj / out_proj)
#   x, Wt arrive as bf16 (MXU-native), accumulation in f32 VMEM scratch.
# ----------------------------------------------------------------------------
def _linear_kernel(x_ref, wt_ref, b_ref, o_ref, acc_ref):
    k = pl.program_id(2)

    @pl.when(k == 0)
    def _():
        acc_ref[...] = jnp.zeros_like(acc_ref)

    # bf16 operands on the MXU, f32 accumulation.
    acc_ref[...] += jnp.dot(x_ref[...], wt_ref[...],
                            preferred_element_type=jnp.float32)

    @pl.when(k == pl.num_programs(2) - 1)
    def _():
        o_ref[...] = (acc_ref[...] + b_ref[...]).astype(o_ref.dtype)


def pallas_linear(x, wt, bias, *, out_dtype):
    """x: (M, K) bf16, wt: (K, N) bf16 (pre-transposed), bias: (N,) f32.
    Returns (M, N) in out_dtype."""
    M, K = x.shape
    N = wt.shape[1]

    # Pad to (8, 128)-friendly extents so tiling / pipelining never degenerates
    # into one huge block.  Zero padding is exact: padded K contributes zeros
    # to the f32 accumulator, padded M/N rows/cols are sliced off below.
    Mp = _round_up(M, 8)
    Kp = _round_up(K, 128)
    Np = _round_up(N, 128)
    xp = x if (Mp == M and Kp == K) else jnp.pad(x, ((0, Mp - M), (0, Kp - K)))
    wtp = wt if (Kp == K and Np == N) else jnp.pad(wt, ((0, Kp - K), (0, Np - N)))
    bp = bias if Np == N else jnp.pad(bias, (0, Np - N))
    b2 = bp.reshape(1, Np).astype(jnp.float32)

    # Big tiles amortize the ~0.35us per-grid-step overhead (v5e/v6e guidance);
    # even at 512x512 the double-buffered working set is only a few MiB.
    tm = _pick_tile(Mp, 512, 8)
    tn = _pick_tile(Np, 512, 128)
    tk = _pick_tile(Kp, 1024, 128)

    grid = (Mp // tm, Np // tn, Kp // tk)
    cost = pl.CostEstimate(
        flops=2 * Mp * Np * Kp,
        transcendentals=0,
        bytes_accessed=2 * (Mp * Kp + Kp * Np)
        + 4 * Np
        + jnp.dtype(out_dtype).itemsize * Mp * Np,
    )
    # TODO(synk): optional sweep: pipeline_mode=pl.Buffered(3) on the weight
    # spec for small-tn / mem-exposed shapes.
    out = pl.pallas_call(
        _linear_kernel,
        out_shape=jax.ShapeDtypeStruct((Mp, Np), out_dtype),
        grid=grid,
        in_specs=[
            pl.BlockSpec((tm, tk), lambda i, j, k: (i, k)),
            pl.BlockSpec((tk, tn), lambda i, j, k: (k, j)),
            pl.BlockSpec((1, tn), lambda i, j, k: (0, j)),
        ],
        out_specs=pl.BlockSpec((tm, tn), lambda i, j, k: (i, j)),
        scratch_shapes=[pltpu.VMEM((tm, tn), jnp.float32)],
        compiler_params=pltpu.CompilerParams(
            dimension_semantics=("parallel", "parallel", "arbitrary"),
            vmem_limit_bytes=48 * 1024 * 1024,
        ),
        cost_estimate=cost,
    )(xp, wtp, b2)
    if Mp != M or Np != N:
        out = out[:M, :N]
    return out


# ----------------------------------------------------------------------------
# Kernel 2: flash-style attention core.
#   grid = (B*H, q_tiles, kv_tiles); each step sees lane-dense (tq, hd) /
#   (tk, hd) blocks of one (batch, head); online softmax state (m, l, acc)
#   lives in VMEM scratch and is reset on the first kv tile.
# ----------------------------------------------------------------------------
def _flash_attn_kernel(q_ref, k_ref, v_ref, o_ref, m_sc, l_sc, acc_sc):
    kv = pl.program_id(2)

    @pl.when(kv == 0)
    def _():
        m_sc[...] = jnp.full_like(m_sc, -jnp.inf)
        l_sc[...] = jnp.zeros_like(l_sc)
        acc_sc[...] = jnp.zeros_like(acc_sc)

    # (tq, hd) x (tk, hd) -> (tq, tk): contract last dims, no explicit k.T.
    # q is pre-scaled (scaling folded into the in-projection weights).
    s = lax.dot_general(q_ref[...], k_ref[...], (((1,), (1,)), ((), ())),
                        preferred_element_type=jnp.float32)
    m_prev = m_sc[...]
    m_new = jnp.maximum(m_prev, jnp.max(s, axis=-1, keepdims=True))
    alpha = jnp.exp(m_prev - m_new)
    p = jnp.exp(s - m_new)
    l_sc[...] = alpha * l_sc[...] + jnp.sum(p, axis=-1, keepdims=True)
    acc_sc[...] = alpha * acc_sc[...] + jnp.dot(
        p.astype(v_ref.dtype), v_ref[...], preferred_element_type=jnp.float32)
    m_sc[...] = m_new

    @pl.when(kv == pl.num_programs(2) - 1)
    def _():
        # Exact normalization (the approximate reciprocal was not accurate
        # enough against the f32 reference).
        o_ref[...] = (acc_sc[...] / l_sc[...]).astype(o_ref.dtype)


def pallas_flash_attention(q, k, v, *, out_dtype):
    """q/k/v: (B*H, T, hd) bf16 -> (B*H, T, hd) out_dtype."""
    BH, T, hd = q.shape
    tq = _pick_tile(T, 256, 8)
    tk = _pick_tile(T, 512, 8)
    grid = (BH, T // tq, T // tk)
    cost = pl.CostEstimate(
        flops=4 * BH * T * T * hd,
        transcendentals=BH * T * T,
        bytes_accessed=2 * 3 * BH * T * hd
        + jnp.dtype(out_dtype).itemsize * BH * T * hd,
    )
    # TODO(synk): for better MXU occupancy when hd < 128, stack 2-4 heads along
    # the N axis of the p@v matmul (wider lane-dense output block).
    return pl.pallas_call(
        _flash_attn_kernel,
        out_shape=jax.ShapeDtypeStruct((BH, T, hd), out_dtype),
        grid=grid,
        in_specs=[
            pl.BlockSpec((None, tq, hd), lambda b, qi, ki: (b, qi, 0)),
            pl.BlockSpec((None, tk, hd), lambda b, qi, ki: (b, ki, 0)),
            pl.BlockSpec((None, tk, hd), lambda b, qi, ki: (b, ki, 0)),
        ],
        out_specs=pl.BlockSpec((None, tq, hd), lambda b, qi, ki: (b, qi, 0)),
        scratch_shapes=[
            pltpu.VMEM((tq, 1), jnp.float32),    # running max m
            pltpu.VMEM((tq, 1), jnp.float32),    # running denom l
            pltpu.VMEM((tq, hd), jnp.float32),   # running numerator acc
        ],
        compiler_params=pltpu.CompilerParams(
            dimension_semantics=("parallel", "parallel", "arbitrary"),
            vmem_limit_bytes=48 * 1024 * 1024,
        ),
        cost_estimate=cost,
    )(q, k, v)


# ----------------------------------------------------------------------------
# One-time parameter preparation (hoisted out of the per-call path)
# ----------------------------------------------------------------------------
def prepare_mha_params(params, num_heads):
    """Fold the q scaling into the in-projection, pre-transpose weights to
    (K, N) layout, and cast weights to bf16 for the MXU (biases stay f32)."""
    w_in, b_in, w_out, b_out = params
    E = w_out.shape[0]
    head_dim = E // num_heads
    scaling = float(head_dim) ** (-0.5)
    w_in_eff = w_in.at[:E, :].multiply(scaling)
    b_in_eff = b_in.at[:E].multiply(scaling)
    return (
        jnp.asarray(w_in_eff.T, jnp.bfloat16),   # (E, 3E)
        jnp.asarray(b_in_eff, jnp.float32),      # (3E,)
        jnp.asarray(w_out.T, jnp.bfloat16),      # (E, E)
        jnp.asarray(b_out, jnp.float32),         # (E,)
    )


# ----------------------------------------------------------------------------
# Full MultiheadAttention forward
# ----------------------------------------------------------------------------
def multihead_attention_forward(query, key, value, prepared, num_heads):
    """query/key/value: (T, B, E) f32.  Returns (T, B, E) f32."""
    # TODO(synk): attention-weight dropout is not implemented (module default
    # dropout_p == 0.0, so it is a no-op anyway).
    # TODO(synk): key/value are only shape-checked — matches the reference
    # module semantics (in-projection chunked from `query`).
    wt_in, b_in, wt_out, b_out = prepared
    T, B, E = query.shape
    assert key.shape == value.shape
    H = num_heads
    hd = E // H

    # (T, B, E) -> (B*T, E), bf16 activations for the MXU / halved HBM traffic.
    x = query.transpose(1, 0, 2).reshape(B * T, E).astype(jnp.bfloat16)

    proj = pallas_linear(x, wt_in, b_in, out_dtype=jnp.bfloat16)      # (B*T, 3E)

    # Heads to the grid: (B*T, 3E) -> (3, B*H, T, hd) lane-dense head blocks
    # (layout plumbing in the wrapper, no in-kernel lane slicing).
    qkv = (proj.reshape(B, T, 3, H, hd)
               .transpose(2, 0, 3, 1, 4)
               .reshape(3, B * H, T, hd))
    attn = pallas_flash_attention(qkv[0], qkv[1], qkv[2],
                                  out_dtype=jnp.bfloat16)             # (B*H, T, hd)

    # (B*H, T, hd) -> (B*T, E)
    attn = (attn.reshape(B, H, T, hd)
                .transpose(0, 2, 1, 3)
                .reshape(B * T, E))

    out = pallas_linear(attn, wt_out, b_out, out_dtype=jnp.float32)   # (B*T, E)
    return out.reshape(B, T, E).transpose(1, 0, 2)                    # (T, B, E)


# ----------------------------------------------------------------------------
# References (pure JAX) for verification
# ----------------------------------------------------------------------------
def reference_forward(query, params, num_heads):
    """Full-f32 semantic reference (PyTorch MHA forward on `query`)."""
    w_in, b_in, w_out, b_out = params
    T, B, E = query.shape
    hd = E // num_heads
    scaling = float(hd) ** (-0.5)
    P = query @ w_in.T + b_in
    q, k, v = jnp.split(P, 3, axis=-1)
    q = q * scaling
    q = q.reshape(T, B * num_heads, hd).transpose(1, 0, 2)
    k = k.reshape(T, B * num_heads, hd).transpose(1, 0, 2)
    v = v.reshape(T, B * num_heads, hd).transpose(1, 0, 2)
    s = jnp.einsum("btd,bsd->bts", q, k)
    p = jax.nn.softmax(s, axis=-1)
    h = jnp.einsum("bts,bsd->btd", p, v)
    h = h.transpose(1, 0, 2).reshape(T, B, E)
    return h @ w_out.T + b_out


def reference_forward_matched(query, prepared, num_heads):
    """Same math as the Pallas path (same bf16 operand rounding) in plain JAX,
    used for a tight numerical check."""
    wt_in, b_in, wt_out, b_out = prepared
    T, B, E = query.shape
    H = num_heads
    hd = E // H
    x = query.astype(jnp.bfloat16).transpose(1, 0, 2).reshape(B * T, E)
    P = (jnp.dot(x, wt_in, preferred_element_type=jnp.float32)
         + b_in).astype(jnp.bfloat16)
    P = P.reshape(B, T, 3, H, hd)
    q = P[:, :, 0].transpose(0, 2, 1, 3).reshape(B * H, T, hd)
    k = P[:, :, 1].transpose(0, 2, 1, 3).reshape(B * H, T, hd)
    v = P[:, :, 2].transpose(0, 2, 1, 3).reshape(B * H, T, hd)
    s = jnp.einsum("bqd,bkd->bqk", q, k, preferred_element_type=jnp.float32)
    m = jnp.max(s, axis=-1, keepdims=True)
    e = jnp.exp(s - m)
    l = jnp.sum(e, axis=-1, keepdims=True)
    h = jnp.einsum("bqk,bkd->bqd", e.astype(jnp.bfloat16), v,
                   preferred_element_type=jnp.float32) / l
    h = h.astype(jnp.bfloat16)
    h = h.reshape(B, H, T, hd).transpose(0, 2, 1, 3).reshape(B * T, E)
    out = jnp.dot(h, wt_out, preferred_element_type=jnp.float32) + b_out
    return out.reshape(B, T, E).transpose(1, 0, 2)


# ----------------------------------------------------------------------------
# Deterministic parameter initialization (mirrors module __init__ shapes)
# ----------------------------------------------------------------------------
def init_params(key, embed_dim):
    k1, k2 = jax.random.split(key)
    fan_in, fan_out = embed_dim, 3 * embed_dim
    bound_in = math.sqrt(6.0 / (fan_in + fan_out))
    w_in = jax.random.uniform(k1, (3 * embed_dim, embed_dim),
                              minval=-bound_in, maxval=bound_in, dtype=jnp.float32)
    b_in = jnp.zeros((3 * embed_dim,), jnp.float32)
    bound_out = math.sqrt(6.0 / (embed_dim + embed_dim))
    w_out = jax.random.uniform(k2, (embed_dim, embed_dim),
                               minval=-bound_out, maxval=bound_out, dtype=jnp.float32)
    b_out = jnp.zeros((embed_dim,), jnp.float32)
    return (w_in, b_in, w_out, b_out)


if __name__ == "__main__":
    T, B, E, H = 8, 2, 32, 4          # tgt_len, batch, embed_dim, num_heads

    root = jax.random.PRNGKey(0)
    kq, kp = jax.random.split(root)
    query = jax.random.normal(kq, (T, B, E), dtype=jnp.float32)
    key_t = query                      # self-attention style inputs
    value_t = query

    params = init_params(kp, E)
    prepared = prepare_mha_params(params, H)   # one-time weight prep (hoisted)

    fwd = jax.jit(multihead_attention_forward, static_argnums=(4,))
    out = jax.block_until_ready(fwd(query, key_t, value_t, prepared, H))
    assert out.shape == (T, B, E)

    # Tight check vs a plain-JAX reference that uses the same bf16 rounding.
    ref_matched = reference_forward_matched(query, prepared, H)
    max_err_matched = float(jnp.max(jnp.abs(out - ref_matched)))
    assert jnp.allclose(out, ref_matched, rtol=1e-2, atol=1e-2), (
        f"mismatch vs matched-precision reference: {max_err_matched}")

    # Loose sanity check vs the full-f32 semantic reference (tolerance sized
    # for bf16 MXU operands vs an f32 reference).
    ref_f32 = reference_forward(query, params, H)
    max_err_f32 = float(jnp.max(jnp.abs(out - ref_f32)))
    assert max_err_f32 < 0.25, (
        f"semantic mismatch vs f32 reference: max abs err {max_err_f32}")

    print("KERNEL_OK")
</pallas_src>

<mosaic_0001>
module attributes {stable_mosaic.version = 11 : i64} {
  func.func @_linear_kernel(%arg0: i32, %arg1: i32, %arg2: i32, %arg3: memref<16x128xbf16, #tpu.memory_space<vmem>>, %arg4: memref<128x128xbf16, #tpu.memory_space<vmem>>, %arg5: memref<1x128xf32, #tpu.memory_space<vmem>>, %arg6: memref<16x128xbf16, #tpu.memory_space<vmem>>, %arg7: memref<16x128xf32, #tpu.memory_space<vmem>>) attributes {dimension_semantics = [#tpu.dimension_semantics<parallel>, #tpu.dimension_semantics<parallel>, #tpu.dimension_semantics<arbitrary>], iteration_bounds = array<i64: 1, 1, 1>, scalar_prefetch = 0 : i64, scratch_operands = 1 : i64, tpu.core_type = #tpu.core_type<tc>, window_params = [{transform_indices = @transform_0, window_bounds = array<i64: 16, 128>}, {transform_indices = @transform_1, window_bounds = array<i64: 128, 128>}, {transform_indices = @transform_2, window_bounds = array<i64: 1, 128>}, {transform_indices = @transform_3, window_bounds = array<i64: 16, 128>}]} {
    %c0_i32 = arith.constant 0 : i32
    %0 = arith.cmpi eq, %arg2, %c0_i32 : i32
    %1 = arith.extui %0 : i1 to i32
    %c0_i32_0 = arith.constant 0 : i32
    %2 = arith.cmpi ne, %1, %c0_i32_0 : i32
    scf.if %2 {
      %cst_10 = arith.constant 0.000000e+00 : f32
      %12 = vector.broadcast %cst_10 : f32 to vector<16x128xf32>
      %c0_11 = arith.constant 0 : index
      %c0_12 = arith.constant 0 : index
      %13 = vector.load %arg7[%c0_11, %c0_12] : memref<16x128xf32, #tpu.memory_space<vmem>>, vector<16x128xf32>
      tpu.vector_store %arg7[%c0_11, %c0_12], %12 {strides = array<i32>} : memref<16x128xf32, #tpu.memory_space<vmem>>, vector<16x128xf32>,
    } else {
    }
    %c0 = arith.constant 0 : index
    %c0_1 = arith.constant 0 : index
    %3 = vector.load %arg7[%c0, %c0_1] : memref<16x128xf32, #tpu.memory_space<vmem>>, vector<16x128xf32>
    %c0_2 = arith.constant 0 : index
    %c0_3 = arith.constant 0 : index
    %4 = vector.load %arg3[%c0_2, %c0_3] : memref<16x128xbf16, #tpu.memory_space<vmem>>, vector<16x128xbf16>
    %c0_4 = arith.constant 0 : index
    %c0_5 = arith.constant 0 : index
    %5 = vector.load %arg4[%c0_4, %c0_5] : memref<128x128xbf16, #tpu.memory_space<vmem>>, vector<128x128xbf16>
    %cst = arith.constant dense<0.000000e+00> : vector<16x128xf32>
    %6 = tpu.matmul %4, %5, %cst {dimension_numbers = #tpu.dot_dimension_numbers<[1], [0], [0], [1], [0, 0, 1, 1], [], []>} : vector<16x128xbf16>, vector<128x128xbf16>, vector<16x128xf32> -> vector<16x128xf32>
    %7 = arith.addf %3, %6 : vector<16x128xf32>
    %c0_6 = arith.constant 0 : index
    %c0_7 = arith.constant 0 : index
    %8 = vector.load %arg7[%c0_6, %c0_7] : memref<16x128xf32, #tpu.memory_space<vmem>>, vector<16x128xf32>
    tpu.vector_store %arg7[%c0_6, %c0_7], %7 {strides = array<i32>} : memref<16x128xf32, #tpu.memory_space<vmem>>, vector<16x128xf32>,
    %c0_i32_8 = arith.constant 0 : i32
    %9 = arith.cmpi eq, %arg2, %c0_i32_8 : i32
    %10 = arith.extui %9 : i1 to i32
    %c0_i32_9 = arith.constant 0 : i32
    %11 = arith.cmpi ne, %10, %c0_i32_9 : i32
    scf.if %11 {
      %c0_10 = arith.constant 0 : index
      %c0_11 = arith.constant 0 : index
      %12 = vector.load %arg7[%c0_10, %c0_11] : memref<16x128xf32, #tpu.memory_space<vmem>>, vector<16x128xf32>
      %c0_12 = arith.constant 0 : index
      %c0_13 = arith.constant 0 : index
      %13 = vector.load %arg5[%c0_12, %c0_13] : memref<1x128xf32, #tpu.memory_space<vmem>>, vector<1x128xf32>
      %14 = vector.broadcast %13 : vector<1x128xf32> to vector<16x128xf32>
      %15 = arith.addf %12, %14 : vector<16x128xf32>
      %16 = arith.truncf %15 : vector<16x128xf32> to vector<16x128xbf16>
      %c0_14 = arith.constant 0 : index
      %c0_15 = arith.constant 0 : index
      %17 = vector.load %arg6[%c0_14, %c0_15] : memref<16x128xbf16, #tpu.memory_space<vmem>>, vector<16x128xbf16>
      tpu.vector_store %arg6[%c0_14, %c0_15], %16 {strides = array<i32>} : memref<16x128xbf16, #tpu.memory_space<vmem>>, vector<16x128xbf16>,
    } else {
    }
    return
  }
  func.func @transform_0(%arg0: i32, %arg1: i32, %arg2: i32) -> (i32, i32) {
    %c0_i32 = arith.constant 0 : i32
    return %arg0, %arg2 : i32, i32
  }
  func.func @transform_1(%arg0: i32, %arg1: i32, %arg2: i32) -> (i32, i32) {
    %c0_i32 = arith.constant 0 : i32
    return %arg2, %arg1 : i32, i32
  }
  func.func @transform_2(%arg0: i32, %arg1: i32, %arg2: i32) -> (i32, i32) {
    %c0_i32 = arith.constant 0 : i32
    %c0_i32_0 = arith.constant 0 : i32
    return %c0_i32, %arg1 : i32, i32
  }
  func.func @transform_3(%arg0: i32, %arg1: i32, %arg2: i32) -> (i32, i32) {
    %c0_i32 = arith.constant 0 : i32
    return %arg0, %arg1 : i32, i32
  }
}

module attributes {stable_mosaic.version = 11 : i64} {
  func.func @_flash_attn_kernel(%arg0: i32, %arg1: i32, %arg2: i32, %arg3: memref<1x8x8xbf16, #tpu.memory_space<vmem>>, %arg4: memref<1x8x8xbf16, #tpu.memory_space<vmem>>, %arg5: memref<1x8x8xbf16, #tpu.memory_space<vmem>>, %arg6: memref<1x8x8xbf16, #tpu.memory_space<vmem>>, %arg7: memref<8x1xf32, #tpu.memory_space<vmem>>, %arg8: memref<8x1xf32, #tpu.memory_space<vmem>>, %arg9: memref<8x8xf32, #tpu.memory_space<vmem>>) attributes {dimension_semantics = [#tpu.dimension_semantics<parallel>, #tpu.dimension_semantics<parallel>, #tpu.dimension_semantics<arbitrary>], iteration_bounds = array<i64: 8, 1, 1>, scalar_prefetch = 0 : i64, scratch_operands = 3 : i64, tpu.core_type = #tpu.core_type<tc>, window_params = [{transform_indices = @transform_0, window_bounds = array<i64: 1, 8, 8>}, {transform_indices = @transform_1, window_bounds = array<i64: 1, 8, 8>}, {transform_indices = @transform_2, window_bounds = array<i64: 1, 8, 8>}, {transform_indices = @transform_3, window_bounds = array<i64: 1, 8, 8>}]} {
    %c0_i32 = arith.constant 0 : i32
    %0 = arith.cmpi eq, %arg2, %c0_i32 : i32
    %1 = arith.extui %0 : i1 to i32
    %c0_i32_0 = arith.constant 0 : i32
    %2 = arith.cmpi ne, %1, %c0_i32_0 : i32
    scf.if %2 {
      %cst_26 = arith.constant 0xFF800000 : f32
      %36 = vector.broadcast %cst_26 : f32 to vector<8x1xf32>
      %c0_27 = arith.constant 0 : index
      %c0_28 = arith.constant 0 : index
      %37 = vector.load %arg7[%c0_27, %c0_28] : memref<8x1xf32, #tpu.memory_space<vmem>>, vector<8x1xf32>
      tpu.vector_store %arg7[%c0_27, %c0_28], %36 {strides = array<i32>} : memref<8x1xf32, #tpu.memory_space<vmem>>, vector<8x1xf32>,
      %cst_29 = arith.constant 0.000000e+00 : f32
      %38 = vector.broadcast %cst_29 : f32 to vector<8x1xf32>
      %c0_30 = arith.constant 0 : index
      %c0_31 = arith.constant 0 : index
      %39 = vector.load %arg8[%c0_30, %c0_31] : memref<8x1xf32, #tpu.memory_space<vmem>>, vector<8x1xf32>
      tpu.vector_store %arg8[%c0_30, %c0_31], %38 {strides = array<i32>} : memref<8x1xf32, #tpu.memory_space<vmem>>, vector<8x1xf32>,
      %cst_32 = arith.constant 0.000000e+00 : f32
      %40 = vector.broadcast %cst_32 : f32 to vector<8x8xf32>
      %c0_33 = arith.constant 0 : index
      %c0_34 = arith.constant 0 : index
      %41 = vector.load %arg9[%c0_33, %c0_34] : memref<8x8xf32, #tpu.memory_space<vmem>>, vector<8x8xf32>
      tpu.vector_store %arg9[%c0_33, %c0_34], %40 {strides = array<i32>} : memref<8x8xf32, #tpu.memory_space<vmem>>, vector<8x8xf32>,
    } else {
    }
    %c0 = arith.constant 0 : index
    %c0_1 = arith.constant 0 : index
    %c0_2 = arith.constant 0 : index
    %3 = vector.load %arg3[%c0, %c0_1, %c0_2] : memref<1x8x8xbf16, #tpu.memory_space<vmem>>, vector<1x8x8xbf16>
    %4 = vector.shape_cast %3 : vector<1x8x8xbf16> to vector<8x8xbf16>
    %c0_3 = arith.constant 0 : index
    %c0_4 = arith.constant 0 : index
    %c0_5 = arith.constant 0 : index
    %5 = vector.load %arg4[%c0_3, %c0_4, %c0_5] : memref<1x8x8xbf16, #tpu.memory_space<vmem>>, vector<1x8x8xbf16>
    %6 = vector.shape_cast %5 : vector<1x8x8xbf16> to vector<8x8xbf16>
    %cst = arith.constant dense<0.000000e+00> : vector<8x8xf32>
    %7 = tpu.matmul %4, %6, %cst {dimension_numbers = #tpu.dot_dimension_numbers<[1], [1], [0], [0], [0, 0, 1, 0], [], []>} : vector<8x8xbf16>, vector<8x8xbf16>, vector<8x8xf32> -> vector<8x8xf32>
    %c0_6 = arith.constant 0 : index
    %c0_7 = arith.constant 0 : index
    %8 = vector.load %arg7[%c0_6, %c0_7] : memref<8x1xf32, #tpu.memory_space<vmem>>, vector<8x1xf32>
    %cst_8 = arith.constant dense<0xFF800000> : vector<8xf32>
    %9 = vector.multi_reduction <maximumf>, %7, %cst_8 [1] : vector<8x8xf32> to vector<8xf32>
    %10 = vector.shape_cast %9 : vector<8xf32> to vector<8x1xf32>
    %11 = arith.maximumf %8, %10 : vector<8x1xf32>
    %12 = arith.subf %8, %11 : vector<8x1xf32>
    %13 = math.exp %12 : vector<8x1xf32>
    %14 = vector.broadcast %11 : vector<8x1xf32> to vector<8x8xf32>
    %15 = arith.subf %7, %14 : vector<8x8xf32>
    %16 = math.exp %15 : vector<8x8xf32>
    %c0_9 = arith.constant 0 : index
    %c0_10 = arith.constant 0 : index
    %17 = vector.load %arg8[%c0_9, %c0_10] : memref<8x1xf32, #tpu.memory_space<vmem>>, vector<8x1xf32>
    %18 = arith.mulf %13, %17 : vector<8x1xf32>
    %cst_11 = arith.constant dense<0.000000e+00> : vector<8xf32>
    %19 = vector.multi_reduction <add>, %16, %cst_11 [1] : vector<8x8xf32> to vector<8xf32>
    %20 = vector.shape_cast %19 : vector<8xf32> to vector<8x1xf32>
    %21 = arith.addf %18, %20 : vector<8x1xf32>
    %c0_12 = arith.constant 0 : index
    %c0_13 = arith.constant 0 : index
    %22 = vector.load %arg8[%c0_12, %c0_13] : memref<8x1xf32, #tpu.memory_space<vmem>>, vector<8x1xf32>
    tpu.vector_store %arg8[%c0_12, %c0_13], %21 {strides = array<i32>} : memref<8x1xf32, #tpu.memory_space<vmem>>, vector<8x1xf32>,
    %c0_14 = arith.constant 0 : index
    %c0_15 = arith.constant 0 : index
    %23 = vector.load %arg9[%c0_14, %c0_15] : memref<8x8xf32, #tpu.memory_space<vmem>>, vector<8x8xf32>
    %24 = vector.broadcast %13 : vector<8x1xf32> to vector<8x8xf32>
    %25 = arith.mulf %24, %23 : vector<8x8xf32>
    %26 = arith.truncf %16 : vector<8x8xf32> to vector<8x8xbf16>
    %c0_16 = arith.constant 0 : index
    %c0_17 = arith.constant 0 : index
    %c0_18 = arith.constant 0 : index
    %27 = vector.load %arg5[%c0_16, %c0_17, %c0_18] : memref<1x8x8xbf16, #tpu.memory_space<vmem>>, vector<1x8x8xbf16>
    %28 = vector.shape_cast %27 : vector<1x8x8xbf16> to vector<8x8xbf16>
    %cst_19 = arith.constant dense<0.000000e+00> : vector<8x8xf32>
    %29 = tpu.matmul %26, %28, %cst_19 {dimension_numbers = #tpu.dot_dimension_numbers<[1], [0], [0], [1], [0, 0, 1, 1], [], []>} : vector<8x8xbf16>, vector<8x8xbf16>, vector<8x8xf32> -> vector<8x8xf32>
    %30 = arith.addf %25, %29 : vector<8x8xf32>
    %c0_20 = arith.constant 0 : index
    %c0_21 = arith.constant 0 : index
    %31 = vector.load %arg9[%c0_20, %c0_21] : memref<8x8xf32, #tpu.memory_space<vmem>>, vector<8x8xf32>
    tpu.vector_store %arg9[%c0_20, %c0_21], %30 {strides = array<i32>} : memref<8x8xf32, #tpu.memory_space<vmem>>, vector<8x8xf32>,
    %c0_22 = arith.constant 0 : index
    %c0_23 = arith.constant 0 : index
    %32 = vector.load %arg7[%c0_22, %c0_23] : memref<8x1xf32, #tpu.memory_space<vmem>>, vector<8x1xf32>
    tpu.vector_store %arg7[%c0_22, %c0_23], %11 {strides = array<i32>} : memref<8x1xf32, #tpu.memory_space<vmem>>, vector<8x1xf32>,
    %c0_i32_24 = arith.constant 0 : i32
    %33 = arith.cmpi eq, %arg2, %c0_i32_24 : i32
    %34 = arith.extui %33 : i1 to i32
    %c0_i32_25 = arith.constant 0 : i32
    %35 = arith.cmpi ne, %34, %c0_i32_25 : i32
    scf.if %35 {
      %c0_26 = arith.constant 0 : index
      %c0_27 = arith.constant 0 : index
      %36 = vector.load %arg9[%c0_26, %c0_27] : memref<8x8xf32, #tpu.memory_space<vmem>>, vector<8x8xf32>
      %c0_28 = arith.constant 0 : index
      %c0_29 = arith.constant 0 : index
      %37 = vector.load %arg8[%c0_28, %c0_29] : memref<8x1xf32, #tpu.memory_space<vmem>>, vector<8x1xf32>
      %38 = vector.broadcast %37 : vector<8x1xf32> to vector<8x8xf32>
      %39 = arith.divf %36, %38 : vector<8x8xf32>
      %40 = arith.truncf %39 : vector<8x8xf32> to vector<8x8xbf16>
      %c0_30 = arith.constant 0 : index
      %c0_31 = arith.constant 0 : index
      %c0_32 = arith.constant 0 : index
      %41 = vector.load %arg6[%c0_30, %c0_31, %c0_32] : memref<1x8x8xbf16, #tpu.memory_space<vmem>>, vector<1x8x8xbf16>
      %42 = vector.shape_cast %41 : vector<1x8x8xbf16> to vector<8x8xbf16>
      %43 = vector.shape_cast %40 : vector<8x8xbf16> to vector<1x8x8xbf16>
      tpu.vector_store %arg6[%c0_30, %c0_31, %c0_32], %43 {strides = array<i32>} : memref<1x8x8xbf16, #tpu.memory_space<vmem>>, vector<1x8x8xbf16>,
    } else {
    }
    return
  }
  func.func @transform_0(%arg0: i32, %arg1: i32, %arg2: i32) -> (i32, i32, i32) {
    %c0_i32 = arith.constant 0 : i32
    %c0_i32_0 = arith.constant 0 : i32
    return %arg0, %arg1, %c0_i32 : i32, i32, i32
  }
  func.func @transform_1(%arg0: i32, %arg1: i32, %arg2: i32) -> (i32, i32, i32) {
    %c0_i32 = arith.constant 0 : i32
    %c0_i32_0 = arith.constant 0 : i32
    return %arg0, %arg2, %c0_i32 : i32, i32, i32
  }
  func.func @transform_2(%arg0: i32, %arg1: i32, %arg2: i32) -> (i32, i32, i32) {
    %c0_i32 = arith.constant 0 : i32
    %c0_i32_0 = arith.constant 0 : i32
    return %arg0, %arg2, %c0_i32 : i32, i32, i32
  }
  func.func @transform_3(%arg0: i32, %arg1: i32, %arg2: i32) -> (i32, i32, i32) {
    %c0_i32 = arith.constant 0 : i32
    %c0_i32_0 = arith.constant 0 : i32
    return %arg0, %arg1, %c0_i32 : i32, i32, i32
  }
}

module attributes {stable_mosaic.version = 11 : i64} {
  func.func @_linear_kernel(%arg0: i32, %arg1: i32, %arg2: i32, %arg3: memref<16x128xbf16, #tpu.memory_space<vmem>>, %arg4: memref<128x128xbf16, #tpu.memory_space<vmem>>, %arg5: memref<1x128xf32, #tpu.memory_space<vmem>>, %arg6: memref<16x128xf32, #tpu.memory_space<vmem>>, %arg7: memref<16x128xf32, #tpu.memory_space<vmem>>) attributes {dimension_semantics = [#tpu.dimension_semantics<parallel>, #tpu.dimension_semantics<parallel>, #tpu.dimension_semantics<arbitrary>], iteration_bounds = array<i64: 1, 1, 1>, scalar_prefetch = 0 : i64, scratch_operands = 1 : i64, tpu.core_type = #tpu.core_type<tc>, window_params = [{transform_indices = @transform_0, window_bounds = array<i64: 16, 128>}, {transform_indices = @transform_1, window_bounds = array<i64: 128, 128>}, {transform_indices = @transform_2, window_bounds = array<i64: 1, 128>}, {transform_indices = @transform_3, window_bounds = array<i64: 16, 128>}]} {
    %c0_i32 = arith.constant 0 : i32
    %0 = arith.cmpi eq, %arg2, %c0_i32 : i32
    %1 = arith.extui %0 : i1 to i32
    %c0_i32_0 = arith.constant 0 : i32
    %2 = arith.cmpi ne, %1, %c0_i32_0 : i32
    scf.if %2 {
      %cst_10 = arith.constant 0.000000e+00 : f32
      %12 = vector.broadcast %cst_10 : f32 to vector<16x128xf32>
      %c0_11 = arith.constant 0 : index
      %c0_12 = arith.constant 0 : index
      %13 = vector.load %arg7[%c0_11, %c0_12] : memref<16x128xf32, #tpu.memory_space<vmem>>, vector<16x128xf32>
      tpu.vector_store %arg7[%c0_11, %c0_12], %12 {strides = array<i32>} : memref<16x128xf32, #tpu.memory_space<vmem>>, vector<16x128xf32>,
    } else {
    }
    %c0 = arith.constant 0 : index
    %c0_1 = arith.constant 0 : index
    %3 = vector.load %arg7[%c0, %c0_1] : memref<16x128xf32, #tpu.memory_space<vmem>>, vector<16x128xf32>
    %c0_2 = arith.constant 0 : index
    %c0_3 = arith.constant 0 : index
    %4 = vector.load %arg3[%c0_2, %c0_3] : memref<16x128xbf16, #tpu.memory_space<vmem>>, vector<16x128xbf16>
    %c0_4 = arith.constant 0 : index
    %c0_5 = arith.constant 0 : index
    %5 = vector.load %arg4[%c0_4, %c0_5] : memref<128x128xbf16, #tpu.memory_space<vmem>>, vector<128x128xbf16>
    %cst = arith.constant dense<0.000000e+00> : vector<16x128xf32>
    %6 = tpu.matmul %4, %5, %cst {dimension_numbers = #tpu.dot_dimension_numbers<[1], [0], [0], [1], [0, 0, 1, 1], [], []>} : vector<16x128xbf16>, vector<128x128xbf16>, vector<16x128xf32> -> vector<16x128xf32>
    %7 = arith.addf %3, %6 : vector<16x128xf32>
    %c0_6 = arith.constant 0 : index
    %c0_7 = arith.constant 0 : index
    %8 = vector.load %arg7[%c0_6, %c0_7] : memref<16x128xf32, #tpu.memory_space<vmem>>, vector<16x128xf32>
    tpu.vector_store %arg7[%c0_6, %c0_7], %7 {strides = array<i32>} : memref<16x128xf32, #tpu.memory_space<vmem>>, vector<16x128xf32>,
    %c0_i32_8 = arith.constant 0 : i32
    %9 = arith.cmpi eq, %arg2, %c0_i32_8 : i32
    %10 = arith.extui %9 : i1 to i32
    %c0_i32_9 = arith.constant 0 : i32
    %11 = arith.cmpi ne, %10, %c0_i32_9 : i32
    scf.if %11 {
      %c0_10 = arith.constant 0 : index
      %c0_11 = arith.constant 0 : index
      %12 = vector.load %arg7[%c0_10, %c0_11] : memref<16x128xf32, #tpu.memory_space<vmem>>, vector<16x128xf32>
      %c0_12 = arith.constant 0 : index
      %c0_13 = arith.constant 0 : index
      %13 = vector.load %arg5[%c0_12, %c0_13] : memref<1x128xf32, #tpu.memory_space<vmem>>, vector<1x128xf32>
      %14 = vector.broadcast %13 : vector<1x128xf32> to vector<16x128xf32>
      %15 = arith.addf %12, %14 : vector<16x128xf32>
      %c0_14 = arith.constant 0 : index
      %c0_15 = arith.constant 0 : index
      %16 = vector.load %arg6[%c0_14, %c0_15] : memref<16x128xf32, #tpu.memory_space<vmem>>, vector<16x128xf32>
      tpu.vector_store %arg6[%c0_14, %c0_15], %15 {strides = array<i32>} : memref<16x128xf32, #tpu.memory_space<vmem>>, vector<16x128xf32>,
    } else {
    }
    return
  }
  func.func @transform_0(%arg0: i32, %arg1: i32, %arg2: i32) -> (i32, i32) {
    %c0_i32 = arith.constant 0 : i32
    return %arg0, %arg2 : i32, i32
  }
  func.func @transform_1(%arg0: i32, %arg1: i32, %arg2: i32) -> (i32, i32) {
    %c0_i32 = arith.constant 0 : i32
    return %arg2, %arg1 : i32, i32
  }
  func.func @transform_2(%arg0: i32, %arg1: i32, %arg2: i32) -> (i32, i32) {
    %c0_i32 = arith.constant 0 : i32
    %c0_i32_0 = arith.constant 0 : i32
    return %c0_i32, %arg1 : i32, i32
  }
  func.func @transform_3(%arg0: i32, %arg1: i32, %arg2: i32) -> (i32, i32) {
    %c0_i32 = arith.constant 0 : i32
    return %arg0, %arg1 : i32, i32
  }
}

</mosaic_0001>

<llo_original>
// kernel: multihead_attention_forward.3
$region0: #{multihead_attention_forward.3}
  #allocation0 [shape = 'u32[]', space=smem, size = 0x4, offset = 0x4, fixed_abs, tag = 'smem constant byte address 0x4 - core index']
  #allocation1 [shape = 'u32[144,128]{1,0:T(1,128)}', space=vmem, size = 0x12000, scoped, tag = 'internal scratch']
  #allocation2 [shape = 'f32[16,128]{1,0:T(8,128)}', space=vmem, size = 0x2000, scoped, tag = 'scratch operand']
  %s0 = inlined_call_operand.vmem [shape: bf16[16,128], index: 0, kind: input, shape index: {}]
  %s1 = inlined_call_operand.vmem [shape: bf16[128,128], index: 1, kind: input, shape index: {}]
  %s2 = inlined_call_operand.vmem [shape: f32[1,128], index: 2, kind: input, shape index: {}]
  %s3 = inlined_call_operand.vmem [shape: bf16[16,128], index: 3, kind: output, shape index: {}]
  %s4 = sld [smem:[#allocation0]]
  $region30: #{multihead_attention_forward.3} parent=0
    _
  %s6 = ssub.s32 1, %s4
  %s7 = scalar_select 0, %s6, %s4
  // Predicated region
  $region2: #{multihead_attention_forward.3} parent=0 // pred_check
    _
  $region3: #{multihead_attention_forward.3} parent=0 // pred_check_branch
    %9 = sbr.rel (0) target = $region5
  $region4: #{multihead_attention_forward.3} parent=0 // pred_region
    _
  $region5: #{multihead_attention_forward.3} parent=0 // pred_fallthru
    _
  // Predicated region
  $region6: #{multihead_attention_forward.3} parent=0 // pred_check
    _
  $region7: #{multihead_attention_forward.3} parent=0 // pred_check_branch
    %11 = sbr.rel (0) target = $region9
  $region8: #{multihead_attention_forward.3} parent=0 // pred_region
    _
  $region9: #{multihead_attention_forward.3} parent=0 // pred_fallthru
    _
  // Predicated region
  $region10: #{multihead_attention_forward.3} parent=0 // pred_check
    _
  $region11: #{multihead_attention_forward.3} parent=0 // pred_check_branch
    %13 = sbr.rel (0) target = $region13
  $region12: #{multihead_attention_forward.3} parent=0 // pred_region
    _
  $region13: #{multihead_attention_forward.3} parent=0 // pred_fallthru
    _
  %p15 = scmp.eq.s32.totalorder 0, 0
  // Predicated region
  $region14: #{multihead_attention_forward.3} parent=0 // pred_check
    %p16 = pneg %p15
  $region15: #{multihead_attention_forward.3} parent=0 // pred_check_branch
    %18 = sbr.rel (%p16) target = $region17
  $region16: #{multihead_attention_forward.3} parent=0 // pred_region
    %19 = vst [vmem:[#allocation2] sm:$0xff] 0.0
    %20 = vst [vmem:[#allocation2 + $0x8] sm:$0xff] 0.0
  $region17: #{multihead_attention_forward.3} parent=0 // pred_fallthru
    _
  %v21 = vld [vmem:[#allocation2] sm:$0xff]
  %v22 = vld [vmem:[#allocation2 + $0x8] sm:$0xff]
  %v23 = vld [vmem:[%s0] sm:$0xf]
  %v24 = vld [vmem:[%s0 + $0x4] sm:$0xf]
  %v25 = vld [vmem:[%s1] sm:$0xf]
  %v26 = vld [vmem:[%s1 + $0x4] sm:$0xf]
  %v27 = vld [vmem:[%s1 + $0x8] sm:$0xf]
  %v28 = vld [vmem:[%s1 + $0xc] sm:$0xf]
  %v29 = vld [vmem:[%s1 + $0x10] sm:$0xf]
  %v30 = vld [vmem:[%s1 + $0x14] sm:$0xf]
  %v31 = vld [vmem:[%s1 + $0x18] sm:$0xf]
  %v32 = vld [vmem:[%s1 + $0x1c] sm:$0xf]
  %v33 = vld [vmem:[%s1 + $0x20] sm:$0xf]
  %v34 = vld [vmem:[%s1 + $0x24] sm:$0xf]
  %v35 = vld [vmem:[%s1 + $0x28] sm:$0xf]
  %v36 = vld [vmem:[%s1 + $0x2c] sm:$0xf]
  %v37 = vld [vmem:[%s1 + $0x30] sm:$0xf]
  %v38 = vld [vmem:[%s1 + $0x34] sm:$0xf]
  %v39 = vld [vmem:[%s1 + $0x38] sm:$0xf]
  %v40 = vld [vmem:[%s1 + $0x3c] sm:$0xf]
  %v43 = vunpack.c.l.b16 %v23
  %v44 = vunpack.c.l.b16 %v24
  %v45 = vpack.c.b16 %v44, %v43
  %v63 = vunpack.c.l.b16 %v25
  %v64 = vunpack.c.l.b16 %v26
  %v65 = vunpack.c.l.b16 %v27
  %v66 = vunpack.c.l.b16 %v28
  %v67 = vunpack.c.l.b16 %v29
  %v68 = vunpack.c.l.b16 %v30
  %v69 = vunpack.c.l.b16 %v31
  %v70 = vunpack.c.l.b16 %v32
  %v71 = vunpack.c.l.b16 %v33
  %v72 = vunpack.c.l.b16 %v34
  %v73 = vunpack.c.l.b16 %v35
  %v74 = vunpack.c.l.b16 %v36
  %v75 = vunpack.c.l.b16 %v37
  %v76 = vunpack.c.l.b16 %v38
  %v77 = vunpack.c.l.b16 %v39
  %v78 = vunpack.c.l.b16 %v40
  %v79 = vpack.c.b16 %v64, %v63
  %v80 = vpack.c.b16 %v66, %v65
  %v81 = vpack.c.b16 %v68, %v67
  %v82 = vpack.c.b16 %v70, %v69
  %v83 = vpack.c.b16 %v72, %v71
  %v84 = vpack.c.b16 %v74, %v73
  %v85 = vpack.c.b16 %v76, %v75
  %v86 = vpack.c.b16 %v78, %v77
  %95 = vmatprep.subr.bf16.mxu0 0
  %96 = vmatpush1.bf16.msra.mxu0 %v79
  %97 = vmatprep.subr.bf16.mxu0 0
  %98 = vmatpush1.bf16.msra.mxu0 %v80
  %99 = vmatprep.subr.bf16.mxu0 0
  %100 = vmatpush1.bf16.msra.mxu0 %v81
  %101 = vmatprep.subr.bf16.mxu0 0
  %102 = vmatpush1.bf16.msra.mxu0 %v82
  %103 = vmatprep.subr.bf16.mxu0 0
  %104 = vmatpush1.bf16.msra.mxu0 %v83
  %105 = vmatprep.subr.bf16.mxu0 0
  %106 = vmatpush1.bf16.msra.mxu0 %v84
  %107 = vmatprep.subr.bf16.mxu0 0
  %108 = vmatpush1.bf16.msra.mxu0 %v85
  %109 = vmatprep.subr.bf16.mxu0 0
  %110 = vmatpush1.bf16.msra.mxu0 %v86
  %111 = vmatprep.subr.bf16.mxu0 0
  %112 = vmatpush1.bf16.msra.mxu0 0
  %113 = vmatprep.subr.bf16.mxu0 0
  %114 = vmatpush1.bf16.msra.mxu0 0
  %115 = vmatprep.subr.bf16.mxu0 0
  %116 = vmatpush1.bf16.msra.mxu0 0
  %117 = vmatprep.subr.bf16.mxu0 0
  %118 = vmatpush1.bf16.msra.mxu0 0
  %119 = vmatprep.subr.bf16.mxu0 0
  %120 = vmatpush1.bf16.msra.mxu0 0
  %121 = vmatprep.subr.bf16.mxu0 0
  %122 = vmatpush1.bf16.msra.mxu0 0
  %123 = vmatprep.subr.bf16.mxu0 0
  %124 = vmatpush1.bf16.msra.mxu0 0
  %125 = vmatprep.subr.bf16.mxu0 0
  %126 = vmatpush1.bf16.msra.mxu0 0
  %127 = vmatprep.mubr.bf16.mxu0 0
  %128 = vmatmul.mubr.bf16.gmra.mrb[0].mxu0 %v45
  %v129 = vpop.f32.mrb[0].mxu0
  %v130 = vadd.f32 0.0, %v129
  %v131 = vpop.f32.mrb[0].mxu0
  %v132 = vpop.f32.mrb[0].mxu0
  %v133 = vadd.f32 0.0, %v132
  %v134 = vpop.f32.mrb[0].mxu0
  %135 = vdwg.mxu0
  %v136 = vadd.f32 %v21, %v130
  %v137 = vadd.f32 %v22, %v133
  %138 = vst [vmem:[#allocation2] sm:$0xff] %v136
  %139 = vst [vmem:[#allocation2 + $0x8] sm:$0xff] %v137
  // Predicated region
  $region18: #{multihead_attention_forward.3} parent=0 // pred_check
    %p140 = pneg %p15
  $region19: #{multihead_attention_forward.3} parent=0 // pred_check_branch
    %142 = sbr.rel (%p140) target = $region21
  $region20: #{multihead_attention_forward.3} parent=0 // pred_region
    %v143 = vld [vmem:[#allocation2] sm:$0xff]
    %v144 = vld [vmem:[#allocation2 + $0x8] sm:$0xff]
    %v145 = vld [vmem:[%s2] sm:$0x1]
    %v147 = vlaneseq
    %v148 = vshrl.u32 %v147, 7
    %v149 = vsub.s32 0, %v148
    %v150 = vrot.slane %v145, %v149
    %v152 = vadd.f32 %v143, %v150
    %v153 = vadd.f32 %v144, %v150
    %v154 = vpack.c.bf16 %v153, %v152
    %v156 = vunpack.c.l.b16 %v154
    %v157 = vunpack.c.h.b16 %v154
    %v158 = vpack.c.b16 %v156, %v156
    %v159 = vpack.c.b16 %v157, %v157
    %162 = vst [vmem:[%s3] sm:$0xf] %v158
    %163 = vst [vmem:[%s3 + $0x4] sm:$0xf] %v159
  $region21: #{multihead_attention_forward.3} parent=0 // pred_fallthru
    _
  // Predicated region
  $region22: #{multihead_attention_forward.3} parent=0 // pred_check
    _
  $region23: #{multihead_attention_forward.3} parent=0 // pred_check_branch
    %165 = sbr.rel (0) target = $region25
  $region24: #{multihead_attention_forward.3} parent=0 // pred_region
    _
  $region25: #{multihead_attention_forward.3} parent=0 // pred_fallthru
    _
  // Predicated region
  $region26: #{multihead_attention_forward.3} parent=0 // pred_check
    _
  $region27: #{multihead_attention_forward.3} parent=0 // pred_check_branch
    %167 = sbr.rel (0) target = $region29
  $region28: #{multihead_attention_forward.3} parent=0 // pred_region
    _
  $region29: #{multihead_attention_forward.3} parent=0 // pred_fallthru
    _

// kernel: multihead_attention_forward.5
$region0: #{multihead_attention_forward.5}
  #allocation0 [shape = 'u32[]', space=smem, size = 0x4, offset = 0x4, fixed_abs, tag = 'smem constant byte address 0x4 - core index']
  #allocation1 [shape = 'u32[144,128]{1,0:T(1,128)}', space=vmem, size = 0x12000, scoped, tag = 'internal scratch']
  #allocation2 [shape = 'f32[16,128]{1,0:T(8,128)}', space=vmem, size = 0x2000, scoped, tag = 'scratch operand']
  %s0 = inlined_call_operand.vmem [shape: bf16[16,128], index: 0, kind: input, shape index: {}]
  %s1 = inlined_call_operand.vmem [shape: bf16[128,128], index: 1, kind: input, shape index: {}]
  %s2 = inlined_call_operand.vmem [shape: f32[1,128], index: 2, kind: input, shape index: {}]
  %s3 = inlined_call_operand.vmem [shape: f32[16,128], index: 3, kind: output, shape index: {}]
  %s4 = sld [smem:[#allocation0]]
  $region30: #{multihead_attention_forward.5} parent=0
    _
  %s6 = ssub.s32 1, %s4
  %s7 = scalar_select 0, %s6, %s4
  // Predicated region
  $region2: #{multihead_attention_forward.5} parent=0 // pred_check
    _
  $region3: #{multihead_attention_forward.5} parent=0 // pred_check_branch
    %9 = sbr.rel (0) target = $region5
  $region4: #{multihead_attention_forward.5} parent=0 // pred_region
    _
  $region5: #{multihead_attention_forward.5} parent=0 // pred_fallthru
    _
  // Predicated region
  $region6: #{multihead_attention_forward.5} parent=0 // pred_check
    _
  $region7: #{multihead_attention_forward.5} parent=0 // pred_check_branch
    %11 = sbr.rel (0) target = $region9
  $region8: #{multihead_attention_forward.5} parent=0 // pred_region
    _
  $region9: #{multihead_attention_forward.5} parent=0 // pred_fallthru
    _
  // Predicated region
  $region10: #{multihead_attention_forward.5} parent=0 // pred_check
    _
  $region11: #{multihead_attention_forward.5} parent=0 // pred_check_branch
    %13 = sbr.rel (0) target = $region13
  $region12: #{multihead_attention_forward.5} parent=0 // pred_region
    _
  $region13: #{multihead_attention_forward.5} parent=0 // pred_fallthru
    _
  %p15 = scmp.eq.s32.totalorder 0, 0
  // Predicated region
  $region14: #{multihead_attention_forward.5} parent=0 // pred_check
    %p16 = pneg %p15
  $region15: #{multihead_attention_forward.5} parent=0 // pred_check_branch
    %18 = sbr.rel (%p16) target = $region17
  $region16: #{multihead_attention_forward.5} parent=0 // pred_region
    %19 = vst [vmem:[#allocation2] sm:$0xff] 0.0
    %20 = vst [vmem:[#allocation2 + $0x8] sm:$0xff] 0.0
  $region17: #{multihead_attention_forward.5} parent=0 // pred_fallthru
    _
  %v21 = vld [vmem:[#allocation2] sm:$0xff]
  %v22 = vld [vmem:[#allocation2 + $0x8] sm:$0xff]
  %v23 = vld [vmem:[%s0] sm:$0xf]
  %v24 = vld [vmem:[%s0 + $0x4] sm:$0xf]
  %v25 = vld [vmem:[%s1] sm:$0xf]
  %v26 = vld [vmem:[%s1 + $0x4] sm:$0xf]
  %v27 = vld [vmem:[%s1 + $0x8] sm:$0xf]
  %v28 = vld [vmem:[%s1 + $0xc] sm:$0xf]
  %v29 = vld [vmem:[%s1 + $0x10] sm:$0xf]
  %v30 = vld [vmem:[%s1 + $0x14] sm:$0xf]
  %v31 = vld [vmem:[%s1 + $0x18] sm:$0xf]
  %v32 = vld [vmem:[%s1 + $0x1c] sm:$0xf]
  %v33 = vld [vmem:[%s1 + $0x20] sm:$0xf]
  %v34 = vld [vmem:[%s1 + $0x24] sm:$0xf]
  %v35 = vld [vmem:[%s1 + $0x28] sm:$0xf]
  %v36 = vld [vmem:[%s1 + $0x2c] sm:$0xf]
  %v37 = vld [vmem:[%s1 + $0x30] sm:$0xf]
  %v38 = vld [vmem:[%s1 + $0x34] sm:$0xf]
  %v39 = vld [vmem:[%s1 + $0x38] sm:$0xf]
  %v40 = vld [vmem:[%s1 + $0x3c] sm:$0xf]
  %v43 = vunpack.c.l.b16 %v23
  %v44 = vunpack.c.l.b16 %v24
  %v45 = vpack.c.b16 %v44, %v43
  %v63 = vunpack.c.l.b16 %v25
  %v64 = vunpack.c.l.b16 %v26
  %v65 = vunpack.c.l.b16 %v27
  %v66 = vunpack.c.l.b16 %v28
  %v67 = vunpack.c.l.b16 %v29
  %v68 = vunpack.c.l.b16 %v30
  %v69 = vunpack.c.l.b16 %v31
  %v70 = vunpack.c.l.b16 %v32
  %v71 = vunpack.c.l.b16 %v33
  %v72 = vunpack.c.l.b16 %v34
  %v73 = vunpack.c.l.b16 %v35
  %v74 = vunpack.c.l.b16 %v36
  %v75 = vunpack.c.l.b16 %v37
  %v76 = vunpack.c.l.b16 %v38
  %v77 = vunpack.c.l.b16 %v39
  %v78 = vunpack.c.l.b16 %v40
  %v79 = vpack.c.b16 %v64, %v63
  %v80 = vpack.c.b16 %v66, %v65
  %v81 = vpack.c.b16 %v68, %v67
  %v82 = vpack.c.b16 %v70, %v69
  %v83 = vpack.c.b16 %v72, %v71
  %v84 = vpack.c.b16 %v74, %v73
  %v85 = vpack.c.b16 %v76, %v75
  %v86 = vpack.c.b16 %v78, %v77
  %95 = vmatprep.subr.bf16.mxu0 0
  %96 = vmatpush1.bf16.msra.mxu0 %v79
  %97 = vmatprep.subr.bf16.mxu0 0
  %98 = vmatpush1.bf16.msra.mxu0 %v80
  %99 = vmatprep.subr.bf16.mxu0 0
  %100 = vmatpush1.bf16.msra.mxu0 %v81
  %101 = vmatprep.subr.bf16.mxu0 0
  %102 = vmatpush1.bf16.msra.mxu0 %v82
  %103 = vmatprep.subr.bf16.mxu0 0
  %104 = vmatpush1.bf16.msra.mxu0 %v83
  %105 = vmatprep.subr.bf16.mxu0 0
  %106 = vmatpush1.bf16.msra.mxu0 %v84
  %107 = vmatprep.subr.bf16.mxu0 0
  %108 = vmatpush1.bf16.msra.mxu0 %v85
  %109 = vmatprep.subr.bf16.mxu0 0
  %110 = vmatpush1.bf16.msra.mxu0 %v86
  %111 = vmatprep.subr.bf16.mxu0 0
  %112 = vmatpush1.bf16.msra.mxu0 0
  %113 = vmatprep.subr.bf16.mxu0 0
  %114 = vmatpush1.bf16.msra.mxu0 0
  %115 = vmatprep.subr.bf16.mxu0 0
  %116 = vmatpush1.bf16.msra.mxu0 0
  %117 = vmatprep.subr.bf16.mxu0 0
  %118 = vmatpush1.bf16.msra.mxu0 0
  %119 = vmatprep.subr.bf16.mxu0 0
  %120 = vmatpush1.bf16.msra.mxu0 0
  %121 = vmatprep.subr.bf16.mxu0 0
  %122 = vmatpush1.bf16.msra.mxu0 0
  %123 = vmatprep.subr.bf16.mxu0 0
  %124 = vmatpush1.bf16.msra.mxu0 0
  %125 = vmatprep.subr.bf16.mxu0 0
  %126 = vmatpush1.bf16.msra.mxu0 0
  %127 = vmatprep.mubr.bf16.mxu0 0
  %128 = vmatmul.mubr.bf16.gmra.mrb[0].mxu0 %v45
  %v129 = vpop.f32.mrb[0].mxu0
  %v130 = vadd.f32 0.0, %v129
  %v131 = vpop.f32.mrb[0].mxu0
  %v132 = vpop.f32.mrb[0].mxu0
  %v133 = vadd.f32 0.0, %v132
  %v134 = vpop.f32.mrb[0].mxu0
  %135 = vdwg.mxu0
  %v136 = vadd.f32 %v21, %v130
  %v137 = vadd.f32 %v22, %v133
  %138 = vst [vmem:[#allocation2] sm:$0xff] %v136
  %139 = vst [vmem:[#allocation2 + $0x8] sm:$0xff] %v137
  // Predicated region
  $region18: #{multihead_attention_forward.5} parent=0 // pred_check
    %p140 = pneg %p15
  $region19: #{multihead_attention_forward.5} parent=0 // pred_check_branch
    %142 = sbr.rel (%p140) target = $region21
  $region20: #{multihead_attention_forward.5} parent=0 // pred_region
    %v143 = vld [vmem:[#allocation2] sm:$0xff]
    %v144 = vld [vmem:[#allocation2 + $0x8] sm:$0xff]
    %v145 = vld [vmem:[%s2] sm:$0x1]
    %v147 = vlaneseq
    %v148 = vshrl.u32 %v147, 7
    %v149 = vsub.s32 0, %v148
    %v150 = vrot.slane %v145, %v149
    %v152 = vadd.f32 %v143, %v150
    %v153 = vadd.f32 %v144, %v150
    %154 = vst [vmem:[%s3] sm:$0xff] %v152
    %155 = vst [vmem:[%s3 + $0x8] sm:$0xff] %v153
  $region21: #{multihead_attention_forward.5} parent=0 // pred_fallthru
    _
  // Predicated region
  $region22: #{multihead_attention_forward.5} parent=0 // pred_check
    _
  $region23: #{multihead_attention_forward.5} parent=0 // pred_check_branch
    %157 = sbr.rel (0) target = $region25
  $region24: #{multihead_attention_forward.5} parent=0 // pred_region
    _
  $region25: #{multihead_attention_forward.5} parent=0 // pred_fallthru
    _
  // Predicated region
  $region26: #{multihead_attention_forward.5} parent=0 // pred_check
    _
  $region27: #{multihead_attention_forward.5} parent=0 // pred_check_branch
    %159 = sbr.rel (0) target = $region29
  $region28: #{multihead_attention_forward.5} parent=0 // pred_region
    _
  $region29: #{multihead_attention_forward.5} parent=0 // pred_fallthru
    _

// kernel: multihead_attention_forward.4
$region0: #{multihead_attention_forward.4}
  #allocation0 [shape = 'u32[]', space=smem, size = 0x4, offset = 0x4, fixed_abs, tag = 'smem constant byte address 0x4 - core index']
  #allocation1 [shape = 'u32[144,128]{1,0:T(1,128)}', space=vmem, size = 0x12000, scoped, tag = 'internal scratch']
  #allocation2 [shape = 'f32[8,1]{1,0:T(8,128)}', space=vmem, size = 0x1000, scoped, tag = 'scratch operand']
  #allocation3 [shape = 'f32[8,1]{1,0:T(8,128)}', space=vmem, size = 0x1000, scoped, tag = 'scratch operand']
  #allocation4 [shape = 'f32[8,8]{1,0:T(8,128)}', space=vmem, size = 0x1000, scoped, tag = 'scratch operand']
  %s0 = inlined_call_operand.vmem [shape: bf16[8,8,8], index: 0, kind: input, shape index: {}]
  %s1 = inlined_call_operand.vmem [shape: bf16[8,8,8], index: 1, kind: input, shape index: {}]
  %s2 = inlined_call_operand.vmem [shape: bf16[8,8,8], index: 2, kind: input, shape index: {}]
  %s3 = inlined_call_operand.vmem [shape: bf16[8,8,8], index: 3, kind: output, shape index: {}]
  %s4 = sld [smem:[#allocation0]]
  $region53: #{multihead_attention_forward.4} parent=0
    _
  %s6 = ssub.s32 1, %s4
  %s7 = scalar_select 0, %s6, %s4
  loop: start=0, step=1, limit=10
  $region2: #{multihead_attention_forward.4} parent=0 // loop_pre_header
    _
  $region3: #{multihead_attention_forward.4} parent=0 // loop_header
    %s9 = sphi 0, %s13
    %p10 = scmp.ge.s32.totalorder %s9, 10
    %s16 = sphi 0, %s35
    %s17 = sphi 0, %s31
    %s18 = sphi 0, %s27
    %s19 = sphi 0, %s16
    %s20 = sphi 0, %s17
    %s21 = sphi 0, %s18
    %s22 = sphi 0, %s19
    %s23 = sphi 0, %s20
    %s24 = sphi 0, %s21
    %s40 = sphi 0, %s42
    %s43 = sphi 0, %s40
    %s44 = sphi 0, %s43
    %s60 = sphi 0, %s44
    %s68 = sphi 0, %s70
    %s71 = sphi 0, %s68
    %s72 = sphi 0, %s71
    %s88 = sphi 0, %s72
    %s96 = sphi 0, %s98
    %s99 = sphi 0, %s96
    %s100 = sphi 0, %s99
    %s116 = sphi 0, %s100
    %s124 = sphi 0, %s126
    %s127 = sphi 0, %s124
    %s128 = sphi 0, %s127
    %s144 = sphi 0, %s128
  $region4: #{multihead_attention_forward.4} parent=0 // loop_header_branch
    %12 = sbr.rel (%p10) target = $region8
  $region5: #{multihead_attention_forward.4} parent=0 // loop_body
    %s14 = ssub.s32 %s9, 1
    %s15 = ssub.s32 %s9, 2
    %s25 = sadd.s32 1, %s18
    %p26 = scmp.ge.s32.totalorder %s25, 1
    %s27 = scalar_select %p26, 0, %s25
    %s28 = sadd.s32 1, %s17
    %s29 = scalar_select %p26, %s28, %s17
    %p30 = scmp.ge.s32.totalorder %s29, 1
    %s31 = scalar_select %p30, 0, %s29
    %s32 = sadd.s32 1, %s16
    %s33 = scalar_select %p30, %s32, %s16
    %p34 = scmp.ge.s32.totalorder %s33, 8
    %s35 = scalar_select %p34, 0, %s33
    %s36 = ssub.s32 %s16, %s35
    %s37 = ssub.s32 %s17, %s31
    %s38 = sor.u32 %s36, %s37
    %p39 = scmp.eq.s32.totalorder %s38, 0
    %s41 = sadd.s32 %s40, 1
    %s42 = scalar_select %p39, %s40, %s41
    %p45 = pneg %p39
    %p46 = scmp.eq.s32.totalorder %s9, 7
    %p47 = por %p45, %p46
    %p48 = scmp.ne.s32.totalorder %s40, %s43
    %p49 = scmp.eq.s32.totalorder %s9, 0
    %p50 = por %p48, %p49
    %p51 = scmp.ne.s32.totalorder %s40, %s43
    %p52 = scmp.eq.s32.totalorder %s14, 7
    %p53 = por %p51, %p52
    %p54 = scmp.ne.s32.totalorder %s43, %s44
    %p55 = scmp.eq.s32.totalorder %s14, 0
    %p56 = por %p54, %p55
    %p57 = scmp.ne.s32.totalorder %s43, %s44
    %p58 = scmp.eq.s32.totalorder %s15, 7
    %p59 = por %p57, %p58
    %p61 = scmp.ne.s32.totalorder %s44, %s60
    %p62 = scmp.eq.s32.totalorder %s15, 0
    %p63 = por %p61, %p62
    %s64 = ssub.s32 %s16, %s35
    %s65 = ssub.s32 %s18, %s27
    %s66 = sor.u32 %s64, %s65
    %p67 = scmp.eq.s32.totalorder %s66, 0
    %s69 = sadd.s32 %s68, 1
    %s70 = scalar_select %p67, %s68, %s69
    %p73 = pneg %p67
    %p74 = scmp.eq.s32.totalorder %s9, 7
    %p75 = por %p73, %p74
    %p76 = scmp.ne.s32.totalorder %s68, %s71
    %p77 = scmp.eq.s32.totalorder %s9, 0
    %p78 = por %p76, %p77
    %p79 = scmp.ne.s32.totalorder %s68, %s71
    %p80 = scmp.eq.s32.totalorder %s14, 7
    %p81 = por %p79, %p80
    %p82 = scmp.ne.s32.totalorder %s71, %s72
    %p83 = scmp.eq.s32.totalorder %s14, 0
    %p84 = por %p82, %p83
    %p85 = scmp.ne.s32.totalorder %s71, %s72
    %p86 = scmp.eq.s32.totalorder %s15, 7
    %p87 = por %p85, %p86
    %p89 = scmp.ne.s32.totalorder %s72, %s88
    %p90 = scmp.eq.s32.totalorder %s15, 0
    %p91 = por %p89, %p90
    %s92 = ssub.s32 %s16, %s35
    %s93 = ssub.s32 %s18, %s27
    %s94 = sor.u32 %s92, %s93
    %p95 = scmp.eq.s32.totalorder %s94, 0
    %s97 = sadd.s32 %s96, 1
    %s98 = scalar_select %p95, %s96, %s97
    %p101 = pneg %p95
    %p102 = scmp.eq.s32.totalorder %s9, 7
    %p103 = por %p101, %p102
    %p104 = scmp.ne.s32.totalorder %s96, %s99
    %p105 = scmp.eq.s32.totalorder %s9, 0
    %p106 = por %p104, %p105
    %p107 = scmp.ne.s32.totalorder %s96, %s99
    %p108 = scmp.eq.s32.totalorder %s14, 7
    %p109 = por %p107, %p108
    %p110 = scmp.ne.s32.totalorder %s99, %s100
    %p111 = scmp.eq.s32.totalorder %s14, 0
    %p112 = por %p110, %p111
    %p113 = scmp.ne.s32.totalorder %s99, %s100
    %p114 = scmp.eq.s32.totalorder %s15, 7
    %p115 = por %p113, %p114
    %p117 = scmp.ne.s32.totalorder %s100, %s116
    %p118 = scmp.eq.s32.totalorder %s15, 0
    %p119 = por %p117, %p118
    %s120 = ssub.s32 %s16, %s35
    %s121 = ssub.s32 %s17, %s31
    %s122 = sor.u32 %s120, %s121
    %p123 = scmp.eq.s32.totalorder %s122, 0
    %s125 = sadd.s32 %s124, 1
    %s126 = scalar_select %p123, %s124, %s125
    %p129 = pneg %p123
    %p130 = scmp.eq.s32.totalorder %s9, 7
    %p131 = por %p129, %p130
    %p132 = scmp.ne.s32.totalorder %s124, %s127
    %p133 = scmp.eq.s32.totalorder %s9, 0
    %p134 = por %p132, %p133
    %p135 = scmp.ne.s32.totalorder %s124, %s127
    %p136 = scmp.eq.s32.totalorder %s14, 7
    %p137 = por %p135, %p136
    %p138 = scmp.ne.s32.totalorder %s127, %s128
    %p139 = scmp.eq.s32.totalorder %s14, 0
    %p140 = por %p138, %p139
    %p141 = scmp.ne.s32.totalorder %s127, %s128
    %p142 = scmp.eq.s32.totalorder %s15, 7
    %p143 = por %p141, %p142
    %p145 = scmp.ne.s32.totalorder %s128, %s144
    %p146 = scmp.eq.s32.totalorder %s15, 0
    %p147 = por %p145, %p146
    %p148 = scmp.le.s32.totalorder 1, %s9
    %p149 = scmp.lt.s32.totalorder %s9, 9
    %p150 = pnand %p148, %p149
    %p151 = pneg %p150
    // Predicated region
    $region9: #{multihead_attention_forward.4} parent=5 // pred_check
      _
    $region10: #{multihead_attention_forward.4} parent=5 // pred_check_branch
      %153 = sbr.rel (%p150) target = $region12
    $region11: #{multihead_attention_forward.4} parent=5 // pred_region
      %s154 = ssub.s32 %s9, 1
    $region12: #{multihead_attention_forward.4} parent=5 // pred_fallthru
      _
    %p155 = scmp.lt.s32.totalorder %s9, 8
    // Predicated region
    $region13: #{multihead_attention_forward.4} parent=5 // pred_check
      %p156 = pneg %p155
    $region14: #{multihead_attention_forward.4} parent=5 // pred_check_branch
      %158 = sbr.rel (%p156) target = $region16
    $region15: #{multihead_attention_forward.4} parent=5 // pred_region
      // Predicated region
      $region17: #{multihead_attention_forward.4} parent=15 // pred_check
        %p159 = pneg %p50
      $region18: #{multihead_attention_forward.4} parent=15 // pred_check_branch
        %161 = sbr.rel (%p159) target = $region20
      $region19: #{multihead_attention_forward.4} parent=15 // pred_region
        %p162 = scmp.lt.s32.totalorder %s16, 7
        %s163 = scalar_select %p162, %s16, 7
        %p164 = scmp.lt.s32.totalorder %s17, 0
        %s165 = scalar_select %p164, %s17, 0
        %s166 = sadd.s32 %s165, %s163
        %s167 = smul.addr %s166, 4
        %s168 = scalar_lea.vmem %s0, %s167
      $region20: #{multihead_attention_forward.4} parent=15 // pred_fallthru
        _
      // Predicated region
      $region21: #{multihead_attention_forward.4} parent=15 // pred_check
        %p169 = pneg %p78
      $region22: #{multihead_attention_forward.4} parent=15 // pred_check_branch
        %171 = sbr.rel (%p169) target = $region24
      $region23: #{multihead_attention_forward.4} parent=15 // pred_region
        %p172 = scmp.lt.s32.totalorder %s16, 7
        %s173 = scalar_select %p172, %s16, 7
        %p174 = scmp.lt.s32.totalorder %s18, 0
        %s175 = scalar_select %p174, %s18, 0
        %s176 = sadd.s32 %s175, %s173
        %s177 = smul.addr %s176, 4
        %s178 = scalar_lea.vmem %s1, %s177
      $region24: #{multihead_attention_forward.4} parent=15 // pred_fallthru
        _
      // Predicated region
      $region25: #{multihead_attention_forward.4} parent=15 // pred_check
        %p179 = pneg %p106
      $region26: #{multihead_attention_forward.4} parent=15 // pred_check_branch
        %181 = sbr.rel (%p179) target = $region28
      $region27: #{multihead_attention_forward.4} parent=15 // pred_region
        %p182 = scmp.lt.s32.totalorder %s16, 7
        %s183 = scalar_select %p182, %s16, 7
        %p184 = scmp.lt.s32.totalorder %s18, 0
        %s185 = scalar_select %p184, %s18, 0
        %s186 = sadd.s32 %s185, %s183
        %s187 = smul.addr %s186, 4
        %s188 = scalar_lea.vmem %s2, %s187
      $region28: #{multihead_attention_forward.4} parent=15 // pred_fallthru
        _
    $region16: #{multihead_attention_forward.4} parent=5 // pred_fallthru
      _
    %p189 = scmp.le.s32.totalorder 1, %s9
    %p190 = scmp.lt.s32.totalorder %s9, 9
    %p191 = pnand %p189, %p190
    %p192 = pneg %p191
    // Predicated region
    $region29: #{multihead_attention_forward.4} parent=5 // pred_check
      _
    $region30: #{multihead_attention_forward.4} parent=5 // pred_check_branch
      %194 = sbr.rel (%p191) target = $region32
    $region31: #{multihead_attention_forward.4} parent=5 // pred_region
      %s195 = ssub.s32 %s9, 1
      %p196 = scmp.lt.s32.totalorder %s19, 7
      %s197 = scalar_select %p196, %s19, 7
      %p198 = scmp.lt.s32.totalorder %s20, 0
      %s199 = scalar_select %p198, %s20, 0
      %s200 = sadd.s32 %s199, %s197
      %s201 = smul.addr %s200, 4
      %s202 = scalar_lea.vmem %s0, %s201
      %p203 = pneg %p56
      %p204 = pneg %p53
      %p205 = scmp.lt.s32.totalorder %s19, 7
      %s206 = scalar_select %p205, %s19, 7
      %p207 = scmp.lt.s32.totalorder %s21, 0
      %s208 = scalar_select %p207, %s21, 0
      %s209 = sadd.s32 %s208, %s206
      %s210 = smul.addr %s209, 4
      %s211 = scalar_lea.vmem %s1, %s210
      %p212 = pneg %p84
      %p213 = pneg %p81
      %p214 = scmp.lt.s32.totalorder %s19, 7
      %s215 = scalar_select %p214, %s19, 7
      %p216 = scmp.lt.s32.totalorder %s21, 0
      %s217 = scalar_select %p216, %s21, 0
      %s218 = sadd.s32 %s217, %s215
      %s219 = smul.addr %s218, 4
      %s220 = scalar_lea.vmem %s2, %s219
      %p221 = pneg %p112
      %p222 = pneg %p109
      %p223 = pneg %p140
      %p224 = pneg %p137
      %p225 = scmp.lt.s32.totalorder %s19, 7
      %s226 = scalar_select %p225, %s19, 7
      %p227 = scmp.lt.s32.totalorder %s20, 0
      %s228 = scalar_select %p227, %s20, 0
      %s229 = sadd.s32 %s228, %s226
      %s230 = smul.addr %s229, 4
      %s231 = scalar_lea.vmem %s3, %s230
      %p232 = scmp.lt.s32.totalorder %s19, 7
      %s233 = scalar_select %p232, %s19, 7
      %p234 = scmp.lt.s32.totalorder %s20, 0
      %s235 = scalar_select %p234, %s20, 0
      %s236 = sadd.s32 %s235, %s233
      %s237 = smul.addr %s236, 4
      %s238 = scalar_lea.vmem %s0, %s237
      %p239 = scmp.lt.s32.totalorder %s19, 7
      %s240 = scalar_select %p239, %s19, 7
      %p241 = scmp.lt.s32.totalorder %s21, 0
      %s242 = scalar_select %p241, %s21, 0
      %s243 = sadd.s32 %s242, %s240
      %s244 = smul.addr %s243, 4
      %s245 = scalar_lea.vmem %s1, %s244
      %p246 = scmp.lt.s32.totalorder %s19, 7
      %s247 = scalar_select %p246, %s19, 7
      %p248 = scmp.lt.s32.totalorder %s21, 0
      %s249 = scalar_select %p248, %s21, 0
      %s250 = sadd.s32 %s249, %s247
      %s251 = smul.addr %s250, 4
      %s252 = scalar_lea.vmem %s2, %s251
      %p253 = scmp.lt.s32.totalorder %s19, 7
      %s254 = scalar_select %p253, %s19, 7
      %p255 = scmp.lt.s32.totalorder %s20, 0
      %s256 = scalar_select %p255, %s20, 0
      %s257 = sadd.s32 %s256, %s254
      %s258 = smul.addr %s257, 4
      %s259 = scalar_lea.vmem %s3, %s258
      %p261 = scmp.eq.s32.totalorder %s21, 0
      // Predicated region
      $region33: #{multihead_attention_forward.4} parent=31 // pred_check
        %p262 = pneg %p261
      $region34: #{multihead_attention_forward.4} parent=31 // pred_check_branch
        %264 = sbr.rel (%p262) target = $region36
      $region35: #{multihead_attention_forward.4} parent=31 // pred_region
        %vm265 = vcmask 7168
        %266 = vst.msk [vmem:[#allocation2] sm:$0xff] %vm265, -inf
        %267 = vst.msk [vmem:[#allocation3] sm:$0xff] %vm265, 0.0
        %vm268 = vcmask 64512
        %269 = vst.msk [vmem:[#allocation4] sm:$0xff] %vm268, 0.0
      $region36: #{multihead_attention_forward.4} parent=31 // pred_fallthru
        _
      %v270 = vld [vmem:[%s238] sm:$0xf]
      %v271 = vld [vmem:[%s245] sm:$0xf]
      %vm272 = vcmask 64512
      %v274 = vsel %vm272, %v270, 0
      %v277 = vsel %vm272, %v271, 0
      %279 = vmatprep.subr.bf16.mxu0 0
      %280 = vmatpush1.bf16.xpose.msra.mxu0 %v277
      %281 = vmatprep.subr.bf16.mxu0 0
      %282 = vmatpush1.bf16.xpose.msra.mxu0 0
      %283 = vmatprep.subr.bf16.mxu0 0
      %284 = vmatpush1.bf16.xpose.msra.mxu0 0
      %285 = vmatprep.subr.bf16.mxu0 0
      %286 = vmatpush1.bf16.xpose.msra.mxu0 0
      %287 = vmatprep.subr.bf16.mxu0 0
      %288 = vmatpush1.bf16.xpose.msra.mxu0 0
      %289 = vmatprep.subr.bf16.mxu0 0
      %290 = vmatpush1.bf16.xpose.msra.mxu0 0
      %291 = vmatprep.subr.bf16.mxu0 0
      %292 = vmatpush1.bf16.xpose.msra.mxu0 0
      %293 = vmatprep.subr.bf16.mxu0 0
      %294 = vmatpush1.bf16.xpose.msra.mxu0 0
      %295 = vmatprep.subr.bf16.mxu0 0
      %296 = vmatpush1.bf16.xpose.msra.mxu0 0
      %297 = vmatprep.subr.bf16.mxu0 0
      %298 = vmatpush1.bf16.xpose.msra.mxu0 0
      %299 = vmatprep.subr.bf16.mxu0 0
      %300 = vmatpush1.bf16.xpose.msra.mxu0 0
      %301 = vmatprep.subr.bf16.mxu0 0
      %302 = vmatpush1.bf16.xpose.msra.mxu0 0
      %303 = vmatprep.subr.bf16.mxu0 0
      %304 = vmatpush1.bf16.xpose.msra.mxu0 0
      %305 = vmatprep.subr.bf16.mxu0 0
      %306 = vmatpush1.bf16.xpose.msra.mxu0 0
      %307 = vmatprep.subr.bf16.mxu0 0
      %308 = vmatpush1.bf16.xpose.msra.mxu0 0
      %309 = vmatprep.subr.bf16.mxu0 0
      %310 = vmatpush1.bf16.xpose.msra.mxu0 0
      %311 = vmatprep.mubr.bf16.mxu0 0
      %312 = vmatmul.mubr.bf16.gmra.mrb[0].mxu0 %v274
      %v313 = vpop.f32.mrb[0].mxu0
      %v314 = vadd.f32 0.0, %v313
      %v315 = vpop.f32.mrb[0].mxu0
      %v316 = vpop.f32.mrb[0].mxu0
      %v317 = vpop.f32.mrb[0].mxu0
      %318 = vdwg.mxu0
      %v319 = vld [vmem:[#allocation2] sm:$0xff]
      %v320 = vsel %vm272, %v314, -inf
      %321 = vmax.xlane.f32.xlu0 %v320
      %v322 = vpop.xlane.xlu0 %321
      %v323 = vmax.f32 %v319, %v322
      %v324 = vsub.f32 %v319, %v323
      %v325 = vmul.f32 %v324, 1.442695
      %v326 = vpow.pop %v325
      %328 = vset.pattern.permute.xlu0 0
      %329 = vperm.xlu0 %328, %v323
      %v330 = vpop.permute.xlu0 %329
      %v332 = vsub.f32 %v314, %v330
      %v333 = vmul.f32 %v332, 1.442695
      %v334 = vpow.pop %v333
      %v335 = vld [vmem:[#allocation3] sm:$0xff]
      %v336 = vmul.f32 %v326, %v335
      %v337 = vsel %vm272, %v334, 0.0
      %338 = vadd.xlane.f32.xlu0 %v337
      %v339 = vpop.xlane.xlu0 %338
      %v340 = vadd.f32 %v336, %v339
      %vm341 = vcmask 7168
      %342 = vst.msk [vmem:[#allocation3] sm:$0xff] %vm341, %v340
      %v343 = vld [vmem:[#allocation4] sm:$0xff]
      %345 = vset.pattern.permute.xlu0 0
      %346 = vperm.xlu0 %345, %v326
      %v347 = vpop.permute.xlu0 %346
      %v349 = vmul.f32 %v347, %v343
      %v350 = vpack.c.bf16 %v334, %v334
      %v351 = vld [vmem:[%s252] sm:$0xf]
      %v353 = vsel %vm272, %v350, 0
      %vm355 = vcmask 1043456
      %v357 = vsel %vm355, %v351, 0
      %359 = vmatprep.subr.bf16.mxu0 0
      %360 = vmatpush1.bf16.msra.mxu0 %v357
      %361 = vmatprep.subr.bf16.mxu0 0
      %362 = vmatpush1.bf16.msra.mxu0 0
      %363 = vmatprep.subr.bf16.mxu0 0
      %364 = vmatpush1.bf16.msra.mxu0 0
      %365 = vmatprep.subr.bf16.mxu0 0
      %366 = vmatpush1.bf16.msra.mxu0 0
      %367 = vmatprep.subr.bf16.mxu0 0
      %368 = vmatpush1.bf16.msra.mxu0 0
      %369 = vmatprep.subr.bf16.mxu0 0
      %370 = vmatpush1.bf16.msra.mxu0 0
      %371 = vmatprep.subr.bf16.mxu0 0
      %372 = vmatpush1.bf16.msra.mxu0 0
      %373 = vmatprep.subr.bf16.mxu0 0
      %374 = vmatpush1.bf16.msra.mxu0 0
      %375 = vmatprep.subr.bf16.mxu0 0
      %376 = vmatpush1.bf16.msra.mxu0 0
      %377 = vmatprep.subr.bf16.mxu0 0
      %378 = vmatpush1.bf16.msra.mxu0 0
      %379 = vmatprep.subr.bf16.mxu0 0
      %380 = vmatpush1.bf16.msra.mxu0 0
      %381 = vmatprep.subr.bf16.mxu0 0
      %382 = vmatpush1.bf16.msra.mxu0 0
      %383 = vmatprep.subr.bf16.mxu0 0
      %384 = vmatpush1.bf16.msra.mxu0 0
      %385 = vmatprep.subr.bf16.mxu0 0
      %386 = vmatpush1.bf16.msra.mxu0 0
      %387 = vmatprep.subr.bf16.mxu0 0
      %388 = vmatpush1.bf16.msra.mxu0 0
      %389 = vmatprep.subr.bf16.mxu0 0
      %390 = vmatpush1.bf16.msra.mxu0 0
      %391 = vmatprep.mubr.bf16.mxu0 0
      %392 = vmatmul.mubr.bf16.gmra.mrb[0].mxu0 %v353
      %v393 = vpop.f32.mrb[0].mxu0
      %v394 = vadd.f32 0.0, %v393
      %v395 = vpop.f32.mrb[0].mxu0
      %v396 = vpop.f32.mrb[0].mxu0
      %v397 = vpop.f32.mrb[0].mxu0
      %398 = vdwg.mxu0
      %v399 = vadd.f32 %v349, %v394
      %400 = vst.msk [vmem:[#allocation4] sm:$0xff] %vm272, %v399
      %401 = vst.msk [vmem:[#allocation2] sm:$0xff] %vm341, %v323
      // Predicated region
      $region37: #{multihead_attention_forward.4} parent=31 // pred_check
        %p402 = pneg %p261
      $region38: #{multihead_attention_forward.4} parent=31 // pred_check_branch
        %404 = sbr.rel (%p402) target = $region40
      $region39: #{multihead_attention_forward.4} parent=31 // pred_region
        %v405 = vld [vmem:[#allocation4] sm:$0xff]
        %v406 = vld [vmem:[#allocation3] sm:$0xff]
        %408 = vset.pattern.permute.xlu0 0
        %409 = vperm.xlu0 %408, %v406
        %v410 = vpop.permute.xlu0 %409
        %v412 = vrcp.pop %v410
        %v413 = vmul.f32 %v405, %v412
        %v414 = vpack.c.bf16 %v413, %v413
        %vm415 = vcmask 60416
        %416 = vst.msk [vmem:[%s259] sm:$0xf] %vm415, %v414
      $region40: #{multihead_attention_forward.4} parent=31 // pred_fallthru
        _
      %p417 = scmp.lt.s32.totalorder %s19, 7
      %s418 = scalar_select %p417, %s19, 7
      %p419 = scmp.lt.s32.totalorder %s20, 0
      %s420 = scalar_select %p419, %s20, 0
      %s421 = sadd.s32 %s420, %s418
      %s422 = smul.addr %s421, 4
      %s423 = scalar_lea.vmem %s3, %s422
      // Predicated region
      $region41: #{multihead_attention_forward.4} parent=31 // pred_check
        %p424 = pneg %p137
      $region42: #{multihead_attention_forward.4} parent=31 // pred_check_branch
        %426 = sbr.rel (%p424) target = $region44
      $region43: #{multihead_attention_forward.4} parent=31 // pred_region
        _
      $region44: #{multihead_attention_forward.4} parent=31 // pred_fallthru
        _
    $region32: #{multihead_attention_forward.4} parent=5 // pred_fallthru
      _
    %p427 = scmp.le.s32.totalorder 2, %s9
    // Predicated region
    $region45: #{multihead_attention_forward.4} parent=5 // pred_check
      %p428 = pneg %p427
    $region46: #{multihead_attention_forward.4} parent=5 // pred_check_branch
      %430 = sbr.rel (%p428) target = $region48
    $region47: #{multihead_attention_forward.4} parent=5 // pred_region
      %s431 = ssub.s32 %s9, 2
      // Predicated region
      $region49: #{multihead_attention_forward.4} parent=47 // pred_check
        %p432 = pneg %p143
      $region50: #{multihead_attention_forward.4} parent=47 // pred_check_branch
        %434 = sbr.rel (%p432) target = $region52
      $region51: #{multihead_attention_forward.4} parent=47 // pred_region
        %p435 = scmp.lt.s32.totalorder %s22, 7
        %s436 = scalar_select %p435, %s22, 7
        %p437 = scmp.lt.s32.totalorder %s23, 0
        %s438 = scalar_select %p437, %s23, 0
        %s439 = sadd.s32 %s438, %s436
        %s440 = smul.addr %s439, 4
        %s441 = scalar_lea.vmem %s3, %s440
      $region52: #{multihead_attention_forward.4} parent=47 // pred_fallthru
        _
    $region48: #{multihead_attention_forward.4} parent=5 // pred_fallthru
      _
  $region6: #{multihead_attention_forward.4} parent=0 // loop_footer
    %s13 = sadd.s32 1, %s9
  $region7: #{multihead_attention_forward.4} parent=0 // loop_footer_branch
    %8 = sbr.rel target = $region3
  $region8: #{multihead_attention_forward.4} parent=0 // loop_exit
    _

</llo_original>
